<compile_context>
chip_gen: v7x
topology: tpu7x:2x2x1
jax: 0.10.0
libtpu: 0.0.40
codegen_flags: <defaults>
</compile_context>

<pallas_src>
import jax
import jax.numpy as jnp
from jax.experimental import pallas as pl
from jax.experimental.pallas import tpu as pltpu


def _kp_embed_kernel(x_ref, w_ref, b_ref, o_ref):
    # x_ref: (TM, K)  g keypoints packed per row (K = 2g, interleaved x/y)
    # w_ref: (K, L)   block-diagonal weight (L = g*E), VMEM-resident
    # b_ref: (1, L)   lane-tiled bias, VMEM-resident
    # o_ref: (TM, L)  packed embeddings
    acc = jnp.dot(x_ref[...], w_ref[...], preferred_element_type=jnp.float32)
    o_ref[...] = (acc + b_ref[...].astype(jnp.float32)).astype(o_ref.dtype)


def _choose_packing(M, E):
    """Largest packing factor g with a lane-dense (multiple-of-128) output row,
    a <=2 MiB block-diagonal weight, preferring g that divides M (no padding)."""
    candidates = (64, 32, 16, 8, 4, 2, 1)
    valid = [g for g in candidates
             if (g == 1 or (g * E) % 128 == 0)
             and 2 * g <= 128
             and g * g * E <= 262144]          # (2g)*(gE)*4 B <= 2 MiB
    for g in valid:                             # prefer no padding / no slice
        if M % g == 0:
            return g
    return valid[0] if valid else 1


def keypoint_embedding(keypoints, weight, bias, *, out_block_bytes=4 << 20):
    """keypoints: (B, N, 2); weight: (E, 2) [PyTorch nn.Linear layout]; bias: (E,)."""
    B, N, two = keypoints.shape
    assert two == 2
    E = weight.shape[0]
    M = B * N
    dtype = keypoints.dtype
    itemsize = jnp.dtype(dtype).itemsize

    g = _choose_packing(M, E)
    K = 2 * g            # packed input width
    L = g * E            # packed output lane width

    mp_rows = -(-M // g)
    m_pad = mp_rows * g

    x = keypoints.reshape(M, 2)
    if m_pad != M:
        # Only hit when no valid g divides M. x padding is tiny (8 B/keypoint);
        # the output prefix-slice below is contiguous and normally fuses — if a
        # consumer can take the padded array, prefer slicing there instead.
        x = jnp.pad(x, ((0, m_pad - M), (0, 0)))
    xp = x.reshape(mp_rows, K)

    # Block-diagonal weight (K, L) and lane-tiled bias (1, L).  Constant-fold
    # under jit; constant index_maps keep them VMEM-resident across grid steps.
    w = weight.T.astype(dtype)                                   # (2, E)
    if g > 1:
        eye = jnp.eye(g, dtype=dtype)
        # w_bd[2j + r, j*E + e] = w[r, e]
        w_bd = (eye[:, None, :, None] * w[None, :, None, :]).reshape(K, L)
    else:
        w_bd = w
    b_t = jnp.tile(bias.astype(dtype).reshape(1, E), (1, g))     # (1, L)

    # Tile selection: ~out_block_bytes lane-dense output block (multiple of 8
    # sublanes), and split into >= 2 grid steps when possible (v7x megacore).
    tm = max(8, (out_block_bytes // (L * itemsize)) // 8 * 8)
    if mp_rows <= 8:
        tm = mp_rows
    else:
        half = -(-mp_rows // 2)
        half = -(-half // 8) * 8
        tm = min(tm, half)
    grid_m = -(-mp_rows // tm)

    cost = pl.CostEstimate(
        flops=4 * M * E,
        transcendentals=0,
        bytes_accessed=itemsize * (2 * M + M * E + K * L + L),
    )

    out = pl.pallas_call(
        _kp_embed_kernel,
        out_shape=jax.ShapeDtypeStruct((mp_rows, L), dtype),
        grid=(grid_m,),
        in_specs=[
            pl.BlockSpec((tm, K), lambda i: (i, 0)),
            pl.BlockSpec((K, L), lambda i: (0, 0)),   # resident across grid steps
            pl.BlockSpec((1, L), lambda i: (0, 0)),   # resident across grid steps
        ],
        out_specs=pl.BlockSpec((tm, L), lambda i: (i, 0)),
        compiler_params=pltpu.CompilerParams(
            dimension_semantics=("parallel",),
        ),
        cost_estimate=cost,
    )(xp, w_bd, b_t)

    # (mp_rows, L) has the identical row-major byte layout as (m_pad, E).
    out = out.reshape(m_pad, E)
    if m_pad != M:
        out = out[:M]
    return out.reshape(B, N, E)


if __name__ == "__main__":
    key = jax.random.PRNGKey(0)
    k_kp, k_w, k_b = jax.random.split(key, 3)

    batch = 2
    num_keypoints = 8
    embedding_dim = 32

    # PyTorch default Linear init range: U(-1/sqrt(in_features), 1/sqrt(in_features))
    bound = 1.0 / jnp.sqrt(2.0)
    weight = jax.random.uniform(k_w, (embedding_dim, 2), jnp.float32, -bound, bound)
    bias = jax.random.uniform(k_b, (embedding_dim,), jnp.float32, -bound, bound)

    keypoints = jax.random.normal(k_kp, (batch, num_keypoints, 2), jnp.float32)

    fn = jax.jit(keypoint_embedding)
    out = fn(keypoints, weight, bias)
    out = jax.block_until_ready(out)

    # Reference (same semantics as nn.Linear: x @ W^T + b)
    ref = keypoints @ weight.T + bias
    assert out.shape == (batch, num_keypoints, embedding_dim)
    assert jnp.allclose(out, ref, atol=1e-5, rtol=1e-5)

    print("KERNEL_OK")
</pallas_src>

<mosaic_0001>
module attributes {stable_mosaic.version = 11 : i64} {
  func.func @_kp_embed_kernel(%arg0: i32, %arg1: memref<1x32xf32, #tpu.memory_space<vmem>>, %arg2: memref<32x512xf32, #tpu.memory_space<vmem>>, %arg3: memref<1x512xf32, #tpu.memory_space<vmem>>, %arg4: memref<1x512xf32, #tpu.memory_space<vmem>>) attributes {dimension_semantics = [#tpu.dimension_semantics<parallel>], iteration_bounds = array<i64: 1>, scalar_prefetch = 0 : i64, scratch_operands = 0 : i64, tpu.core_type = #tpu.core_type<tc>, window_params = [{transform_indices = @transform_0, window_bounds = array<i64: 1, 32>}, {pipeline_mode = #tpu.pipeline_mode<synchronous>, transform_indices = @transform_1, window_bounds = array<i64: 32, 512>}, {pipeline_mode = #tpu.pipeline_mode<synchronous>, transform_indices = @transform_2, window_bounds = array<i64: 1, 512>}, {transform_indices = @transform_3, window_bounds = array<i64: 1, 512>}]} {
    %c0 = arith.constant 0 : index
    %c0_0 = arith.constant 0 : index
    %0 = vector.load %arg1[%c0, %c0_0] : memref<1x32xf32, #tpu.memory_space<vmem>>, vector<1x32xf32>
    %c0_1 = arith.constant 0 : index
    %c0_2 = arith.constant 0 : index
    %1 = vector.load %arg2[%c0_1, %c0_2] : memref<32x512xf32, #tpu.memory_space<vmem>>, vector<32x512xf32>
    %cst = arith.constant dense<0.000000e+00> : vector<1x512xf32>
    %2 = tpu.matmul %0, %1, %cst {dimension_numbers = #tpu.dot_dimension_numbers<[1], [0], [0], [1], [0, 0, 1, 1], [], []>} : vector<1x32xf32>, vector<32x512xf32>, vector<1x512xf32> -> vector<1x512xf32>
    %c0_3 = arith.constant 0 : index
    %c0_4 = arith.constant 0 : index
    %3 = vector.load %arg3[%c0_3, %c0_4] : memref<1x512xf32, #tpu.memory_space<vmem>>, vector<1x512xf32>
    %4 = arith.addf %2, %3 : vector<1x512xf32>
    %c0_5 = arith.constant 0 : index
    %c0_6 = arith.constant 0 : index
    %5 = vector.load %arg4[%c0_5, %c0_6] : memref<1x512xf32, #tpu.memory_space<vmem>>, vector<1x512xf32>
    tpu.vector_store %arg4[%c0_5, %c0_6], %4 {strides = array<i32>} : memref<1x512xf32, #tpu.memory_space<vmem>>, vector<1x512xf32>,
    return
  }
  func.func @transform_0(%arg0: i32) -> (i32, i32) {
    %c0_i32 = arith.constant 0 : i32
    %c0_i32_0 = arith.constant 0 : i32
    return %arg0, %c0_i32 : i32, i32
  }
  func.func @transform_1(%arg0: i32) -> (i32, i32) {
    %c0_i32 = arith.constant 0 : i32
    %c0_i32_0 = arith.constant 0 : i32
    %c0_i32_1 = arith.constant 0 : i32
    return %c0_i32, %c0_i32_0 : i32, i32
  }
  func.func @transform_2(%arg0: i32) -> (i32, i32) {
    %c0_i32 = arith.constant 0 : i32
    %c0_i32_0 = arith.constant 0 : i32
    %c0_i32_1 = arith.constant 0 : i32
    return %c0_i32, %c0_i32_0 : i32, i32
  }
  func.func @transform_3(%arg0: i32) -> (i32, i32) {
    %c0_i32 = arith.constant 0 : i32
    %c0_i32_0 = arith.constant 0 : i32
    return %arg0, %c0_i32 : i32, i32
  }
}

</mosaic_0001>

<llo_original>
// kernel: keypoint_embedding.1
$region0: #{keypoint_embedding.1}
  #allocation0 [shape = 'u32[]', space=smem, size = 0x4, offset = 0x4, fixed_abs, tag = 'smem constant byte address 0x4 - core index']
  #allocation1 [shape = 'u32[144,128]{1,0:T(1,128)}', space=vmem, size = 0x12000, scoped, tag = 'internal scratch']
  %s0 = inlined_call_operand.vmem [shape: f32[1,32], index: 0, kind: input, shape index: {}]
  %s1 = inlined_call_operand.vmem [shape: f32[32,512], index: 1, kind: input, shape index: {}]
  %s2 = inlined_call_operand.vmem [shape: f32[1,512], index: 2, kind: input, shape index: {}]
  %s3 = inlined_call_operand.vmem [shape: f32[1,512], index: 3, kind: output, shape index: {}]
  %s4 = sld [smem:[#allocation0]]
  $region22: #{keypoint_embedding.1} parent=0
    _
  %s6 = ssub.s32 1, %s4
  %s7 = scalar_select 0, %s6, %s4
  // Predicated region
  $region2: #{keypoint_embedding.1} parent=0 // pred_check
    _
  $region3: #{keypoint_embedding.1} parent=0 // pred_check_branch
    %9 = sbr.rel (0) target = $region5
  $region4: #{keypoint_embedding.1} parent=0 // pred_region
    _
  $region5: #{keypoint_embedding.1} parent=0 // pred_fallthru
    _
  // Predicated region
  $region6: #{keypoint_embedding.1} parent=0 // pred_check
    _
  $region7: #{keypoint_embedding.1} parent=0 // pred_check_branch
    %11 = sbr.rel (0) target = $region9
  $region8: #{keypoint_embedding.1} parent=0 // pred_region
    _
  $region9: #{keypoint_embedding.1} parent=0 // pred_fallthru
    _
  // Predicated region
  $region10: #{keypoint_embedding.1} parent=0 // pred_check
    _
  $region11: #{keypoint_embedding.1} parent=0 // pred_check_branch
    %13 = sbr.rel (0) target = $region13
  $region12: #{keypoint_embedding.1} parent=0 // pred_region
    _
  $region13: #{keypoint_embedding.1} parent=0 // pred_fallthru
    _
  %v14 = vld [vmem:[%s0] sm:$0x1]
  %v15 = vld [vmem:[%s1] sm:$0xff]
  %v16 = vld [vmem:[%s1 + $0x8] sm:$0xff]
  %v17 = vld [vmem:[%s1 + $0x10] sm:$0xff]
  %v18 = vld [vmem:[%s1 + $0x18] sm:$0xff]
  %v19 = vld [vmem:[%s1 + $0x20] sm:$0xff]
  %v20 = vld [vmem:[%s1 + $0x28] sm:$0xff]
  %v21 = vld [vmem:[%s1 + $0x30] sm:$0xff]
  %v22 = vld [vmem:[%s1 + $0x38] sm:$0xff]
  %v23 = vld [vmem:[%s1 + $0x40] sm:$0xff]
  %v24 = vld [vmem:[%s1 + $0x48] sm:$0xff]
  %v25 = vld [vmem:[%s1 + $0x50] sm:$0xff]
  %v26 = vld [vmem:[%s1 + $0x58] sm:$0xff]
  %v27 = vld [vmem:[%s1 + $0x60] sm:$0xff]
  %v28 = vld [vmem:[%s1 + $0x68] sm:$0xff]
  %v29 = vld [vmem:[%s1 + $0x70] sm:$0xff]
  %v30 = vld [vmem:[%s1 + $0x78] sm:$0xff]
  %v31 = vld [vmem:[%s2] sm:$0xf]
  %v33 = vlaneseq
  %v34 = vshrl.u32 %v33, 7
  %v35 = vsub.s32 0, %v34
  %v36 = vrot.slane %v31, %v35
  %v37 = vlaneseq
  %v38 = vshrl.u32 %v37, 7
  %v39 = vsub.s32 1, %v38
  %v40 = vrot.slane %v31, %v39
  %v41 = vlaneseq
  %v42 = vshrl.u32 %v41, 7
  %v43 = vsub.s32 2, %v42
  %v44 = vrot.slane %v31, %v43
  %v45 = vlaneseq
  %v46 = vshrl.u32 %v45, 7
  %v47 = vsub.s32 3, %v46
  %v48 = vrot.slane %v31, %v47
  %vm53 = vcmask 261120
  %v55 = vsel %vm53, %v14, 0
  %57 = vmatprep.subr.mxu0 %v16
  %58 = vmatpush1.msra.mxu0 %v15
  %59 = vmatprep.subr.mxu0 %v20
  %60 = vmatpush1.msra.mxu0 %v19
  %61 = vmatprep.subr.mxu0 %v24
  %62 = vmatpush1.msra.mxu0 %v23
  %63 = vmatprep.subr.mxu0 %v28
  %64 = vmatpush1.msra.mxu0 %v27
  %65 = vmatprep.subr.mxu0 0.0
  %66 = vmatpush1.msra.mxu0 0.0
  %67 = vmatprep.subr.mxu0 0.0
  %68 = vmatpush1.msra.mxu0 0.0
  %69 = vmatprep.subr.mxu0 0.0
  %70 = vmatpush1.msra.mxu0 0.0
  %71 = vmatprep.subr.mxu0 0.0
  %72 = vmatpush1.msra.mxu0 0.0
  %73 = vmatprep.subr.mxu0 0.0
  %74 = vmatpush1.msra.mxu0 0.0
  %75 = vmatprep.subr.mxu0 0.0
  %76 = vmatpush1.msra.mxu0 0.0
  %77 = vmatprep.subr.mxu0 0.0
  %78 = vmatpush1.msra.mxu0 0.0
  %79 = vmatprep.subr.mxu0 0.0
  %80 = vmatpush1.msra.mxu0 0.0
  %81 = vmatprep.subr.mxu0 0.0
  %82 = vmatpush1.msra.mxu0 0.0
  %83 = vmatprep.subr.mxu0 0.0
  %84 = vmatpush1.msra.mxu0 0.0
  %85 = vmatprep.subr.mxu0 0.0
  %86 = vmatpush1.msra.mxu0 0.0
  %87 = vmatprep.subr.mxu0 0.0
  %88 = vmatpush1.msra.mxu0 0.0
  %89 = vmatprep.subr.mxu0 0.0
  %90 = vmatpush1.msra.mxu0 0.0
  %91 = vmatprep.subr.mxu0 0.0
  %92 = vmatpush1.msra.mxu0 0.0
  %93 = vmatprep.subr.mxu0 0.0
  %94 = vmatpush1.msra.mxu0 0.0
  %95 = vmatprep.subr.mxu0 0.0
  %96 = vmatpush1.msra.mxu0 0.0
  %97 = vmatprep.subr.mxu0 0.0
  %98 = vmatpush1.msra.mxu0 0.0
  %99 = vmatprep.subr.mxu0 0.0
  %100 = vmatpush1.msra.mxu0 0.0
  %101 = vmatprep.subr.mxu0 0.0
  %102 = vmatpush1.msra.mxu0 0.0
  %103 = vmatprep.subr.mxu0 0.0
  %104 = vmatpush1.msra.mxu0 0.0
  %105 = vmatprep.subr.mxu0 0.0
  %106 = vmatpush1.msra.mxu0 0.0
  %107 = vmatprep.subr.mxu0 0.0
  %108 = vmatpush1.msra.mxu0 0.0
  %109 = vmatprep.subr.mxu0 0.0
  %110 = vmatpush1.msra.mxu0 0.0
  %111 = vmatprep.subr.mxu0 0.0
  %112 = vmatpush1.msra.mxu0 0.0
  %113 = vmatprep.subr.mxu0 0.0
  %114 = vmatpush1.msra.mxu0 0.0
  %115 = vmatprep.subr.mxu0 0.0
  %116 = vmatpush1.msra.mxu0 0.0
  %117 = vmatprep.subr.mxu0 0.0
  %118 = vmatpush1.msra.mxu0 0.0
  %119 = vmatprep.subr.mxu0 0.0
  %120 = vmatpush1.msra.mxu0 0.0
  %121 = vmatprep.mubr.f32.mxu0 0.0
  %122 = vmatmul.mubr.f32.gmra.mrb[0].mxu0 %v55
  %v123 = vpop.f32.mrb[0].mxu0
  %v124 = vadd.f32 %v36, %v123
  %v125 = vpop.f32.mrb[0].mxu0
  %v126 = vadd.f32 %v40, %v125
  %127 = vdwg.mxu0
  %128 = vmatprep.subr.mxu0 %v18
  %129 = vmatpush1.msra.mxu0 %v17
  %130 = vmatprep.subr.mxu0 %v22
  %131 = vmatpush1.msra.mxu0 %v21
  %132 = vmatprep.subr.mxu0 %v26
  %133 = vmatpush1.msra.mxu0 %v25
  %134 = vmatprep.subr.mxu0 %v30
  %135 = vmatpush1.msra.mxu0 %v29
  %136 = vmatprep.subr.mxu0 0.0
  %137 = vmatpush1.msra.mxu0 0.0
  %138 = vmatprep.subr.mxu0 0.0
  %139 = vmatpush1.msra.mxu0 0.0
  %140 = vmatprep.subr.mxu0 0.0
  %141 = vmatpush1.msra.mxu0 0.0
  %142 = vmatprep.subr.mxu0 0.0
  %143 = vmatpush1.msra.mxu0 0.0
  %144 = vmatprep.subr.mxu0 0.0
  %145 = vmatpush1.msra.mxu0 0.0
  %146 = vmatprep.subr.mxu0 0.0
  %147 = vmatpush1.msra.mxu0 0.0
  %148 = vmatprep.subr.mxu0 0.0
  %149 = vmatpush1.msra.mxu0 0.0
  %150 = vmatprep.subr.mxu0 0.0
  %151 = vmatpush1.msra.mxu0 0.0
  %152 = vmatprep.subr.mxu0 0.0
  %153 = vmatpush1.msra.mxu0 0.0
  %154 = vmatprep.subr.mxu0 0.0
  %155 = vmatpush1.msra.mxu0 0.0
  %156 = vmatprep.subr.mxu0 0.0
  %157 = vmatpush1.msra.mxu0 0.0
  %158 = vmatprep.subr.mxu0 0.0
  %159 = vmatpush1.msra.mxu0 0.0
  %160 = vmatprep.subr.mxu0 0.0
  %161 = vmatpush1.msra.mxu0 0.0
  %162 = vmatprep.subr.mxu0 0.0
  %163 = vmatpush1.msra.mxu0 0.0
  %164 = vmatprep.subr.mxu0 0.0
  %165 = vmatpush1.msra.mxu0 0.0
  %166 = vmatprep.subr.mxu0 0.0
  %167 = vmatpush1.msra.mxu0 0.0
  %168 = vmatprep.subr.mxu0 0.0
  %169 = vmatpush1.msra.mxu0 0.0
  %170 = vmatprep.subr.mxu0 0.0
  %171 = vmatpush1.msra.mxu0 0.0
  %172 = vmatprep.subr.mxu0 0.0
  %173 = vmatpush1.msra.mxu0 0.0
  %174 = vmatprep.subr.mxu0 0.0
  %175 = vmatpush1.msra.mxu0 0.0
  %176 = vmatprep.subr.mxu0 0.0
  %177 = vmatpush1.msra.mxu0 0.0
  %178 = vmatprep.subr.mxu0 0.0
  %179 = vmatpush1.msra.mxu0 0.0
  %180 = vmatprep.subr.mxu0 0.0
  %181 = vmatpush1.msra.mxu0 0.0
  %182 = vmatprep.subr.mxu0 0.0
  %183 = vmatpush1.msra.mxu0 0.0
  %184 = vmatprep.subr.mxu0 0.0
  %185 = vmatpush1.msra.mxu0 0.0
  %186 = vmatprep.subr.mxu0 0.0
  %187 = vmatpush1.msra.mxu0 0.0
  %188 = vmatprep.subr.mxu0 0.0
  %189 = vmatpush1.msra.mxu0 0.0
  %190 = vmatprep.subr.mxu0 0.0
  %191 = vmatpush1.msra.mxu0 0.0
  %192 = vmatprep.mubr.f32.mxu0 0.0
  %193 = vmatmul.mubr.f32.gmra.mrb[0].mxu0 %v55
  %v194 = vpop.f32.mrb[0].mxu0
  %v195 = vadd.f32 %v44, %v194
  %v196 = vpop.f32.mrb[0].mxu0
  %v197 = vadd.f32 %v48, %v196
  %198 = vdwg.mxu0
  %v203 = vcombine.low %v124, %v126
  %v204 = vcombine.low %v195, %v197
  %v206 = vunpack.c.l.s4 1966171168
  %v207 = vunpack.c.0.s8 %v206
  %v208 = vlaneseq
  %v209 = vshrl.u32 %v208, 7
  %v210 = vsub.s32 %v207, %v209
  %v211 = vrot.slane %v203, %v210
  %v213 = vunpack.c.l.s4 1966171168
  %v214 = vunpack.c.0.s8 %v213
  %v215 = vlaneseq
  %v216 = vshrl.u32 %v215, 7
  %v217 = vsub.s32 %v214, %v216
  %v218 = vrot.slane %v204, %v217
  %v219 = vcombine.low %v211, %v218
  %v221 = vunpack.c.l.s4 1966171168
  %v222 = vunpack.c.0.s8 %v221
  %v223 = vlaneseq
  %v224 = vshrl.u32 %v223, 7
  %v225 = vsub.s32 %v222, %v224
  %v226 = vrot.slane %v219, %v225
  %v228 = vlaneseq
  %vm229 = vcmp.ge.s32.totalorder %v228, 0
  %vm230 = vcmp.lt.s32.totalorder %v228, 512
  %vm231 = vmand %vm229, %vm230
  %232 = vst.msk [vmem:[%s3] sm:$0xf] %vm231, %v226
  // Predicated region
  $region14: #{keypoint_embedding.1} parent=0 // pred_check
    _
  $region15: #{keypoint_embedding.1} parent=0 // pred_check_branch
    %234 = sbr.rel (0) target = $region17
  $region16: #{keypoint_embedding.1} parent=0 // pred_region
    _
  $region17: #{keypoint_embedding.1} parent=0 // pred_fallthru
    _
  // Predicated region
  $region18: #{keypoint_embedding.1} parent=0 // pred_check
    _
  $region19: #{keypoint_embedding.1} parent=0 // pred_check_branch
    %236 = sbr.rel (0) target = $region21
  $region20: #{keypoint_embedding.1} parent=0 // pred_region
    _
  $region21: #{keypoint_embedding.1} parent=0 // pred_fallthru
    _

</llo_original>
